<compile_context>
chip_gen: v6e
topology: v6e:2x2x1
jax: 0.10.0
libtpu: 0.0.40
codegen_flags: <defaults>
</compile_context>

<pallas_src>
import functools

import jax
import jax.numpy as jnp
from jax.experimental import pallas as pl
from jax.experimental.pallas import tpu as pltpu

_EPS = 1e-6
_LANES = 128
_SUBLANES = 8
_CHUNK_ROWS = 512              # reduce-path inner chunk: (512,128) f32 = 256 KiB/array
_MAX_TILE_ROWS_REDUCE = 8192   # 4 MiB/input -> 16 MiB double-buffered
_MAX_TILE_ROWS_NONE = 4096     # 2 in + 1 out double-buffered = 12 MiB (+ intermediates)


def _round_up(x, m):
    return ((x + m - 1) // m) * m


def _loss_f32(x, t):
    x32 = x.astype(jnp.float32)
    t32 = t.astype(jnp.float32)
    # Plain divide: DMA is the binding resource; VALU/EUP have ample slack.
    return jnp.abs(t32 - x32) / (jnp.abs(t32) + jnp.float32(_EPS))


def _mape_partial_kernel(x_ref, t_ref, p_ref, *, valid_rows, need_mask):
    """Per-grid-block (8,128) f32 partial sum of the elementwise loss."""
    tile_rows = x_ref.shape[0]
    row0 = pl.program_id(0) * tile_rows

    def chunk_sum(r, nrows):
        loss = _loss_f32(x_ref[pl.ds(r, nrows), :], t_ref[pl.ds(r, nrows), :])
        if need_mask:
            # Partial last grid block: rows past the array end hold garbage
            # (possibly NaN/Inf) -> mask the computed LOSS before accumulating
            # (jnp.where selects, so NaN in the dead branch cannot propagate).
            ridx = row0 + r + jax.lax.broadcasted_iota(
                jnp.int32, (nrows, _LANES), 0)
            loss = jnp.where(ridx < valid_rows, loss, jnp.float32(0.0))
        # Keep the partial as one (8,128) slab: pure VPU adds, no cross-lane
        # reduce and no scalar round-trip inside the hot loop.
        return jnp.sum(loss.reshape(nrows // _SUBLANES, _SUBLANES, _LANES), axis=0)

    if tile_rows <= _CHUNK_ROWS:
        p_ref[...] = chunk_sum(0, tile_rows)
    else:
        # tile_rows is constructed as a multiple of _CHUNK_ROWS.
        n_chunks = tile_rows // _CHUNK_ROWS

        def body(c, acc):
            r = pl.multiple_of(c * _CHUNK_ROWS, _CHUNK_ROWS)
            return acc + chunk_sum(r, _CHUNK_ROWS)

        p_ref[...] = jax.lax.fori_loop(
            0, n_chunks, body, jnp.zeros((_SUBLANES, _LANES), jnp.float32))


def _mape_elementwise_kernel(x_ref, t_ref, o_ref):
    # Out-of-bounds rows of a partial last block are discarded on writeback.
    o_ref[...] = _loss_f32(x_ref[...], t_ref[...]).astype(o_ref.dtype)


def _prep_2d(inputs, targets):
    """Present inputs/targets as a lane-dense (rows_aligned, 128) slab.

    Pads (full copy) only when n is not a multiple of 8*128; tile alignment is
    NOT required (partial last grid block is handled in-kernel).
    """
    n = inputs.size
    rows = pl.cdiv(n, _LANES)
    rows_aligned = max(_round_up(rows, _SUBLANES), _SUBLANES)
    padded_n = rows_aligned * _LANES
    if padded_n == n:
        x2d = inputs.reshape(rows_aligned, _LANES)       # metadata-only
        t2d = targets.reshape(rows_aligned, _LANES)
    else:
        pad = padded_n - n                               # < 1024 elements
        x2d = jnp.pad(inputs.reshape(-1), (0, pad)).reshape(rows_aligned, _LANES)
        t2d = jnp.pad(targets.reshape(-1), (0, pad)).reshape(rows_aligned, _LANES)
    return x2d, t2d, n, rows_aligned, padded_n


def _pick_tile_rows(rows_aligned, max_tile_rows):
    """Largest allowed tile, but split so the grid has >= 2 blocks whenever
    possible (keeps both v7x TensorCores + their DMA engines streaming)."""
    tile = min(max_tile_rows, _round_up(pl.cdiv(rows_aligned, 2), _SUBLANES))
    if tile > _CHUNK_ROWS:
        # keep the in-kernel chunk loop exact (_MAX_* are multiples of _CHUNK_ROWS)
        tile = min(max_tile_rows, _round_up(tile, _CHUNK_ROWS))
    return max(tile, _SUBLANES)


def _compiler_params(tile_rows, n_buffers):
    # ~2x the double-buffered working set (f32 upper bound) for headroom over
    # elementwise intermediates; explicit so v5e's 16 MiB default scoped VMEM
    # does not cap the tile, while staying well inside v7x's 64 MiB physical.
    dbl_buffered = n_buffers * 2 * tile_rows * _LANES * 4
    vmem_limit = int(min(max(2 * dbl_buffered, 16 << 20), 48 << 20))
    return pltpu.CompilerParams(
        dimension_semantics=("parallel",),
        vmem_limit_bytes=vmem_limit,
    )


def mape_loss(inputs, targets, reduction="mean"):
    if reduction not in ("none", "mean", "sum"):
        raise ValueError(f"Invalid reduction mode: {reduction}")
    assert inputs.shape == targets.shape

    x2d, t2d, n, rows_aligned, padded_n = _prep_2d(inputs, targets)

    if reduction == "none":
        out_dtype = jnp.result_type(inputs.dtype, targets.dtype)
        if not jnp.issubdtype(out_dtype, jnp.floating):
            out_dtype = jnp.float32
        tile_rows = _pick_tile_rows(rows_aligned, _MAX_TILE_ROWS_NONE)
        grid = (pl.cdiv(rows_aligned, tile_rows),)
        tile_spec = pl.BlockSpec((tile_rows, _LANES), lambda i: (i, 0))
        out2d = pl.pallas_call(
            _mape_elementwise_kernel,
            out_shape=jax.ShapeDtypeStruct((rows_aligned, _LANES), out_dtype),
            grid_spec=pltpu.PrefetchScalarGridSpec(
                num_scalar_prefetch=0,
                grid=grid,
                in_specs=[tile_spec, tile_spec],
                out_specs=tile_spec,
            ),
            compiler_params=_compiler_params(tile_rows, n_buffers=3),
        )(x2d, t2d)
        if padded_n == n:
            return out2d.reshape(inputs.shape)
        return out2d.reshape(-1)[:n].reshape(inputs.shape)

    # 'mean' / 'sum': per-block (8,128) partials, tiny final sum in XLA.
    tile_rows = _pick_tile_rows(rows_aligned, _MAX_TILE_ROWS_REDUCE)
    grid = (pl.cdiv(rows_aligned, tile_rows),)
    tile_spec = pl.BlockSpec((tile_rows, _LANES), lambda i: (i, 0))
    kernel = functools.partial(
        _mape_partial_kernel,
        valid_rows=rows_aligned,                      # static at trace time
        need_mask=(rows_aligned % tile_rows != 0),    # emit mask only if needed
    )
    partials = pl.pallas_call(
        kernel,
        out_shape=jax.ShapeDtypeStruct((grid[0] * _SUBLANES, _LANES), jnp.float32),
        grid_spec=pltpu.PrefetchScalarGridSpec(
            num_scalar_prefetch=0,
            grid=grid,
            in_specs=[tile_spec, tile_spec],
            out_specs=pl.BlockSpec((_SUBLANES, _LANES), lambda i: (i, 0)),
        ),
        compiler_params=_compiler_params(tile_rows, n_buffers=2),
    )(x2d, t2d)
    total = jnp.sum(partials)
    if reduction == "mean":
        return total / jnp.float32(n)
    return total


if __name__ == "__main__":
    key = jax.random.PRNGKey(0)
    k1, k2, k3, k4, k5, k6, k7, k8 = jax.random.split(key, 8)

    # small NCHW-like shapes consistent with typical MAPELoss usage
    x = jax.random.normal(k1, (2, 4, 16, 16), dtype=jnp.float32)
    t = jax.random.normal(k2, (2, 4, 16, 16), dtype=jnp.float32)
    ref = jnp.abs(t - x) / (jnp.abs(t) + _EPS)
    loss_mean = jax.block_until_ready(mape_loss(x, t, reduction="mean"))
    loss_sum = jax.block_until_ready(mape_loss(x, t, reduction="sum"))
    loss_none = jax.block_until_ready(mape_loss(x, t, reduction="none"))
    assert jnp.allclose(loss_mean, ref.mean(), rtol=1e-4, atol=1e-5)
    assert jnp.allclose(loss_sum, ref.sum(), rtol=1e-4, atol=1e-3)
    assert loss_none.shape == x.shape
    assert jnp.allclose(loss_none, ref, rtol=1e-5, atol=1e-6)

    # ragged (non-lane-aligned) shape exercises the small zero-pad path
    xr = jax.random.normal(k3, (3, 5, 7), dtype=jnp.float32)
    tr = jax.random.normal(k4, (3, 5, 7), dtype=jnp.float32)
    ref_r = jnp.abs(tr - xr) / (jnp.abs(tr) + _EPS)
    lm = jax.block_until_ready(mape_loss(xr, tr, reduction="mean"))
    ln = jax.block_until_ready(mape_loss(xr, tr, reduction="none"))
    assert jnp.allclose(lm, ref_r.mean(), rtol=1e-4, atol=1e-5)
    assert ln.shape == xr.shape
    assert jnp.allclose(ln, ref_r, rtol=1e-5, atol=1e-6)

    # lane-aligned but NOT tile-aligned: exercises partial-last-block masking
    xm = jax.random.normal(k5, (3, 8, 128), dtype=jnp.float32)
    tmg = jax.random.normal(k6, (3, 8, 128), dtype=jnp.float32)
    ref_m = jnp.abs(tmg - xm) / (jnp.abs(tmg) + _EPS)
    assert jnp.allclose(jax.block_until_ready(mape_loss(xm, tmg, "mean")),
                        ref_m.mean(), rtol=1e-4, atol=1e-5)
    assert jnp.allclose(jax.block_until_ready(mape_loss(xm, tmg, "sum")),
                        ref_m.sum(), rtol=1e-4, atol=1e-3)
    lmn = jax.block_until_ready(mape_loss(xm, tmg, reduction="none"))
    assert lmn.shape == xm.shape
    assert jnp.allclose(lmn, ref_m, rtol=1e-5, atol=1e-6)

    # larger slab exercises the in-kernel chunked fori_loop accumulation path
    xb = jax.random.normal(k7, (8, 128, 256), dtype=jnp.float32)
    tb = jax.random.normal(k8, (8, 128, 256), dtype=jnp.float32)
    ref_b = jnp.abs(tb - xb) / (jnp.abs(tb) + _EPS)
    assert jnp.allclose(jax.block_until_ready(mape_loss(xb, tb, "mean")),
                        ref_b.mean(), rtol=5e-4, atol=1e-5)
    assert jnp.allclose(jax.block_until_ready(mape_loss(xb, tb, "sum")),
                        ref_b.sum(), rtol=5e-4, atol=1e-2)

    print("KERNEL_OK")
</pallas_src>

<mosaic_0001>
module attributes {stable_mosaic.version = 11 : i64} {
  func.func @_mape_partial_kernel(%arg0: i32, %arg1: memref<8x128xf32, #tpu.memory_space<vmem>>, %arg2: memref<8x128xf32, #tpu.memory_space<vmem>>, %arg3: memref<8x128xf32, #tpu.memory_space<vmem>>) attributes {dimension_semantics = [#tpu.dimension_semantics<parallel>], iteration_bounds = array<i64: 2>, scalar_prefetch = 0 : i64, scratch_operands = 0 : i64, tpu.core_type = #tpu.core_type<tc>, window_params = [{transform_indices = @transform_0, window_bounds = array<i64: 8, 128>}, {transform_indices = @transform_1, window_bounds = array<i64: 8, 128>}, {transform_indices = @transform_2, window_bounds = array<i64: 8, 128>}]} {
    %c0 = arith.constant 0 : index
    %c0_0 = arith.constant 0 : index
    %0 = vector.load %arg1[%c0, %c0_0] : memref<8x128xf32, #tpu.memory_space<vmem>>, vector<8x128xf32>
    %c0_1 = arith.constant 0 : index
    %c0_2 = arith.constant 0 : index
    %1 = vector.load %arg2[%c0_1, %c0_2] : memref<8x128xf32, #tpu.memory_space<vmem>>, vector<8x128xf32>
    %2 = arith.subf %1, %0 : vector<8x128xf32>
    %3 = math.absf %2 : vector<8x128xf32>
    %4 = math.absf %1 : vector<8x128xf32>
    %cst = arith.constant 9.99999997E-7 : f32
    %5 = vector.broadcast %cst : f32 to vector<8x128xf32>
    %6 = arith.addf %4, %5 : vector<8x128xf32>
    %7 = arith.divf %3, %6 : vector<8x128xf32>
    %8 = vector.shape_cast %7 : vector<8x128xf32> to vector<1x8x128xf32>
    %cst_3 = arith.constant dense<0.000000e+00> : vector<8x128xf32>
    %9 = vector.multi_reduction <add>, %8, %cst_3 [0] : vector<1x8x128xf32> to vector<8x128xf32>
    %c0_4 = arith.constant 0 : index
    %c0_5 = arith.constant 0 : index
    %10 = vector.load %arg3[%c0_4, %c0_5] : memref<8x128xf32, #tpu.memory_space<vmem>>, vector<8x128xf32>
    tpu.vector_store %arg3[%c0_4, %c0_5], %9 {strides = array<i32>} : memref<8x128xf32, #tpu.memory_space<vmem>>, vector<8x128xf32>,
    return
  }
  func.func @transform_0(%arg0: i32) -> (i32, i32) {
    %c0_i32 = arith.constant 0 : i32
    %c0_i32_0 = arith.constant 0 : i32
    return %arg0, %c0_i32 : i32, i32
  }
  func.func @transform_1(%arg0: i32) -> (i32, i32) {
    %c0_i32 = arith.constant 0 : i32
    %c0_i32_0 = arith.constant 0 : i32
    return %arg0, %c0_i32 : i32, i32
  }
  func.func @transform_2(%arg0: i32) -> (i32, i32) {
    %c0_i32 = arith.constant 0 : i32
    %c0_i32_0 = arith.constant 0 : i32
    return %arg0, %c0_i32 : i32, i32
  }
}

</mosaic_0001>

<llo_original>
// kernel: tpu_custom_call.1
$region0: #{tpu_custom_call.1}
  #allocation0 [shape = 'u32[]', space=smem, size = 0x4, offset = 0x4, fixed_abs, tag = 'smem constant byte address 0x4 - core index']
  #allocation1 [shape = 'u32[144,128]{1,0:T(1,128)}', space=vmem, size = 0x12000, scoped, tag = 'internal scratch']
  %s0 = inlined_call_operand.hbm [shape: f32[16,128], index: 0, kind: input, shape index: {}]
  %s1 = inlined_call_operand.hbm [shape: f32[16,128], index: 1, kind: input, shape index: {}]
  %s2 = inlined_call_operand.hbm [shape: f32[16,128], index: 2, kind: output, shape index: {}]
  %s3 = sld [smem:[#allocation0]]
  $region49: #{tpu_custom_call.1} parent=0
    _
  %s5 = ssub.s32 1, %s3
  %s6 = scalar_select 0, %s5, %s3
  $region1: #{tpu_custom_call.1} parent=0
    #allocation2 [shape = 'u8[8192]{0}', space=vmem, size = 0x2000, scoped, tag = 'input window, operand 0']
    #allocation3 [shape = 's32[2]{0}', space=sflag, size = 0x8, scoped, tag = 'scoped memory for tpu_custom_call.1']
    #allocation4 [shape = 's32[2]{0}', space=sflag, size = 0x8, scoped, tag = 'scoped memory for tpu_custom_call.1']
    #allocation5 [shape = 'u8[8192]{0}', space=vmem, size = 0x2000, scoped, tag = 'input window, operand 1']
    #allocation6 [shape = 's32[2]{0}', space=sflag, size = 0x8, scoped, tag = 'scoped memory for tpu_custom_call.1']
    #allocation7 [shape = 'u8[8192]{0}', space=vmem, size = 0x2000, scoped, tag = 'output window, operand 0']
    %7 = vsyncpa [#allocation3], 0
    %s8 = scalar_lea.sflag [#allocation3], 1
    %9 = vsyncpa %s8, 0
    %10 = vsyncpa [#allocation6], 0
    %s11 = scalar_lea.sflag [#allocation6], 1
    %12 = vsyncpa %s11, 0
    %13 = vsyncpa [#allocation4], 0
    %s14 = scalar_lea.sflag [#allocation4], 1
    %15 = vsyncpa %s14, 0
    loop: start=0, step=1, limit=4
    $region2: #{tpu_custom_call.1} parent=1 // loop_pre_header
      _
    $region3: #{tpu_custom_call.1} parent=1 // loop_header
      %s17 = sphi 0, %s21
      %p18 = scmp.ge.s32.totalorder %s17, 4
      %s27 = sphi 0, %s29
      %s30 = sphi 0, %s27
      %s31 = sphi 0, %s30
      %s47 = sphi 0, %s31
      %s53 = sphi 0, %s55
      %s56 = sphi 0, %s53
      %s57 = sphi 0, %s56
      %s73 = sphi 0, %s57
      %s79 = sphi 0, %s81
      %s82 = sphi 0, %s79
      %s83 = sphi 0, %s82
      %s99 = sphi 0, %s83
    $region4: #{tpu_custom_call.1} parent=1 // loop_header_branch
      %20 = sbr.rel (%p18) target = $region8
    $region5: #{tpu_custom_call.1} parent=1 // loop_body
      %s22 = ssub.s32 %s17, 1
      %s23 = ssub.s32 %s17, 2
      %s24 = sadd.s32 %s17, 1
      %s25 = ssub.s32 %s17, %s24
      %p26 = scmp.eq.s32.totalorder %s25, 0
      %s28 = sadd.s32 %s27, 1
      %s29 = scalar_select %p26, %s27, %s28
      %p32 = pneg %p26
      %p33 = scmp.eq.s32.totalorder %s17, 1
      %p34 = por %p32, %p33
      %p35 = scmp.ne.s32.totalorder %s27, %s30
      %p36 = scmp.eq.s32.totalorder %s17, 0
      %p37 = por %p35, %p36
      %p38 = scmp.ne.s32.totalorder %s27, %s30
      %p39 = scmp.eq.s32.totalorder %s22, 1
      %p40 = por %p38, %p39
      %p41 = scmp.ne.s32.totalorder %s30, %s31
      %p42 = scmp.eq.s32.totalorder %s22, 0
      %p43 = por %p41, %p42
      %p44 = scmp.ne.s32.totalorder %s30, %s31
      %p45 = scmp.eq.s32.totalorder %s23, 1
      %p46 = por %p44, %p45
      %p48 = scmp.ne.s32.totalorder %s31, %s47
      %p49 = scmp.eq.s32.totalorder %s23, 0
      %p50 = por %p48, %p49
      %s51 = ssub.s32 %s17, %s24
      %p52 = scmp.eq.s32.totalorder %s51, 0
      %s54 = sadd.s32 %s53, 1
      %s55 = scalar_select %p52, %s53, %s54
      %p58 = pneg %p52
      %p59 = scmp.eq.s32.totalorder %s17, 1
      %p60 = por %p58, %p59
      %p61 = scmp.ne.s32.totalorder %s53, %s56
      %p62 = scmp.eq.s32.totalorder %s17, 0
      %p63 = por %p61, %p62
      %p64 = scmp.ne.s32.totalorder %s53, %s56
      %p65 = scmp.eq.s32.totalorder %s22, 1
      %p66 = por %p64, %p65
      %p67 = scmp.ne.s32.totalorder %s56, %s57
      %p68 = scmp.eq.s32.totalorder %s22, 0
      %p69 = por %p67, %p68
      %p70 = scmp.ne.s32.totalorder %s56, %s57
      %p71 = scmp.eq.s32.totalorder %s23, 1
      %p72 = por %p70, %p71
      %p74 = scmp.ne.s32.totalorder %s57, %s73
      %p75 = scmp.eq.s32.totalorder %s23, 0
      %p76 = por %p74, %p75
      %s77 = ssub.s32 %s17, %s24
      %p78 = scmp.eq.s32.totalorder %s77, 0
      %s80 = sadd.s32 %s79, 1
      %s81 = scalar_select %p78, %s79, %s80
      %p84 = pneg %p78
      %p85 = scmp.eq.s32.totalorder %s17, 1
      %p86 = por %p84, %p85
      %p87 = scmp.ne.s32.totalorder %s79, %s82
      %p88 = scmp.eq.s32.totalorder %s17, 0
      %p89 = por %p87, %p88
      %p90 = scmp.ne.s32.totalorder %s79, %s82
      %p91 = scmp.eq.s32.totalorder %s22, 1
      %p92 = por %p90, %p91
      %p93 = scmp.ne.s32.totalorder %s82, %s83
      %p94 = scmp.eq.s32.totalorder %s22, 0
      %p95 = por %p93, %p94
      %p96 = scmp.ne.s32.totalorder %s82, %s83
      %p97 = scmp.eq.s32.totalorder %s23, 1
      %p98 = por %p96, %p97
      %p100 = scmp.ne.s32.totalorder %s83, %s99
      %p101 = scmp.eq.s32.totalorder %s23, 0
      %p102 = por %p100, %p101
      %p103 = scmp.le.s32.totalorder 1, %s17
      %p104 = scmp.lt.s32.totalorder %s17, 3
      %p105 = pnand %p103, %p104
      %p106 = pneg %p105
      // Predicated region
      $region9: #{tpu_custom_call.1} parent=5 // pred_check
        _
      $region10: #{tpu_custom_call.1} parent=5 // pred_check_branch
        %108 = sbr.rel (%p105) target = $region12
      $region11: #{tpu_custom_call.1} parent=5 // pred_region
        %s109 = ssub.s32 %s17, 1
      $region12: #{tpu_custom_call.1} parent=5 // pred_fallthru
        _
      %p110 = scmp.lt.s32.totalorder %s17, 2
      // Predicated region
      $region13: #{tpu_custom_call.1} parent=5 // pred_check
        %p111 = pneg %p110
      $region14: #{tpu_custom_call.1} parent=5 // pred_check_branch
        %113 = sbr.rel (%p111) target = $region16
      $region15: #{tpu_custom_call.1} parent=5 // pred_region
        // Predicated region
        $region17: #{tpu_custom_call.1} parent=15 // pred_check
          %p114 = pneg %p37
        $region18: #{tpu_custom_call.1} parent=15 // pred_check_branch
          %116 = sbr.rel (%p114) target = $region20
        $region19: #{tpu_custom_call.1} parent=15 // pred_region
          %s117 = sand.u32 %s27, 1
          %s118 = scalar_lea.sflag [#allocation3], %s117
          %s119 = sand.u32 %s27, 1
          %s120 = smul.addr %s119, 8
          %s121 = scalar_lea.vmem [#allocation2], %s120
          %s123 = ssub.s32 128, 128
          %124 = vsyncadd %s118, %s123
          %s125 = smul.addr %s17, 128
          %s126 = scalar_lea.hbm %s0, %s125
          %s128 = sshll.u32 %s121, 4
          %s129 = int_to_ptr.vmem [resolvable:$true] %s128
          %131 = dma.hbm_to_vmem [thread:$0]  %s126, 128, %s129, %s118
        $region20: #{tpu_custom_call.1} parent=15 // pred_fallthru
          _
        // Predicated region
        $region21: #{tpu_custom_call.1} parent=15 // pred_check
          %p132 = pneg %p63
        $region22: #{tpu_custom_call.1} parent=15 // pred_check_branch
          %134 = sbr.rel (%p132) target = $region24
        $region23: #{tpu_custom_call.1} parent=15 // pred_region
          %s135 = sand.u32 %s53, 1
          %s136 = scalar_lea.sflag [#allocation6], %s135
          %s137 = sand.u32 %s53, 1
          %s138 = smul.addr %s137, 8
          %s139 = scalar_lea.vmem [#allocation5], %s138
          %s141 = ssub.s32 128, 128
          %142 = vsyncadd %s136, %s141
          %s143 = smul.addr %s17, 128
          %s144 = scalar_lea.hbm %s1, %s143
          %s146 = sshll.u32 %s139, 4
          %s147 = int_to_ptr.vmem [resolvable:$true] %s146
          %149 = dma.hbm_to_vmem [thread:$0]  %s144, 128, %s147, %s136
        $region24: #{tpu_custom_call.1} parent=15 // pred_fallthru
          _
      $region16: #{tpu_custom_call.1} parent=5 // pred_fallthru
        _
      %p150 = scmp.le.s32.totalorder 1, %s17
      %p151 = scmp.lt.s32.totalorder %s17, 3
      %p152 = pnand %p150, %p151
      %p153 = pneg %p152
      // Predicated region
      $region25: #{tpu_custom_call.1} parent=5 // pred_check
        _
      $region26: #{tpu_custom_call.1} parent=5 // pred_check_branch
        %155 = sbr.rel (%p152) target = $region28
      $region27: #{tpu_custom_call.1} parent=5 // pred_region
        %s156 = ssub.s32 %s17, 1
        %s157 = sand.u32 %s30, 1
        %s158 = scalar_lea.sflag [#allocation3], %s157
        %s159 = sand.u32 %s30, 1
        %s160 = smul.addr %s159, 8
        %s161 = scalar_lea.vmem [#allocation2], %s160
        // Predicated region
        $region29: #{tpu_custom_call.1} parent=27 // pred_check
          %p162 = pneg %p43
        $region30: #{tpu_custom_call.1} parent=27 // pred_check_branch
          %164 = sbr.rel (%p162) target = $region32
        $region31: #{tpu_custom_call.1} parent=27 // pred_region
          %165 = dma.done %s158, 128
        $region32: #{tpu_custom_call.1} parent=27 // pred_fallthru
          _
        %s166 = sand.u32 %s56, 1
        %s167 = scalar_lea.sflag [#allocation6], %s166
        %s168 = sand.u32 %s56, 1
        %s169 = smul.addr %s168, 8
        %s170 = scalar_lea.vmem [#allocation5], %s169
        // Predicated region
        $region33: #{tpu_custom_call.1} parent=27 // pred_check
          %p171 = pneg %p69
        $region34: #{tpu_custom_call.1} parent=27 // pred_check_branch
          %173 = sbr.rel (%p171) target = $region36
        $region35: #{tpu_custom_call.1} parent=27 // pred_region
          %174 = dma.done %s167, 128
        $region36: #{tpu_custom_call.1} parent=27 // pred_fallthru
          _
        %s175 = sand.u32 %s30, 1
        %s176 = scalar_lea.sflag [#allocation3], %s175
        %s177 = sand.u32 %s30, 1
        %s178 = smul.addr %s177, 8
        %s179 = scalar_lea.vmem [#allocation2], %s178
        %p180 = pneg %p43
        %p181 = pneg %p40
        %s182 = sand.u32 %s56, 1
        %s183 = scalar_lea.sflag [#allocation6], %s182
        %s184 = sand.u32 %s56, 1
        %s185 = smul.addr %s184, 8
        %s186 = scalar_lea.vmem [#allocation5], %s185
        %p187 = pneg %p69
        %p188 = pneg %p66
        %p189 = pneg %p95
        %p190 = pneg %p92
        %s191 = sand.u32 %s82, 1
        %s192 = scalar_lea.sflag [#allocation4], %s191
        %s193 = sand.u32 %s82, 1
        %s194 = smul.addr %s193, 8
        %s195 = scalar_lea.vmem [#allocation7], %s194
        %v196 = vld [vmem:[%s161] sm:$0xff]
        %v197 = vld [vmem:[%s170] sm:$0xff]
        %v198 = vsub.f32 %v197, %v196
        %v199 = vand.u32 2147483647, %v198
        %v200 = vand.u32 2147483647, %v197
        %v201 = vadd.f32 %v200, 1e-06
        %v202 = vrcp.pop %v201
        %v203 = vmul.f32 %v199, %v202
        %v204 = vadd.f32 %v203, 0.0
        %205 = vst [vmem:[%s195] sm:$0xff] %v204
        %s206 = sand.u32 %s82, 1
        %s207 = scalar_lea.sflag [#allocation4], %s206
        %s208 = sand.u32 %s82, 1
        %s209 = smul.addr %s208, 8
        %s210 = scalar_lea.vmem [#allocation7], %s209
        // Predicated region
        $region37: #{tpu_custom_call.1} parent=27 // pred_check
          %p211 = pneg %p92
        $region38: #{tpu_custom_call.1} parent=27 // pred_check_branch
          %213 = sbr.rel (%p211) target = $region40
        $region39: #{tpu_custom_call.1} parent=27 // pred_region
          %s215 = ssub.s32 128, 128
          %216 = vsyncadd %s207, %s215
          %s217 = smul.addr %s22, 128
          %s218 = scalar_lea.hbm %s2, %s217
          %s220 = sshll.u32 %s210, 4
          %s221 = int_to_ptr.vmem [resolvable:$true] %s220
          %223 = dma.vmem_to_hbm [thread:$0]  %s221, 128, %s218, %s207
        $region40: #{tpu_custom_call.1} parent=27 // pred_fallthru
          _
      $region28: #{tpu_custom_call.1} parent=5 // pred_fallthru
        _
      %p224 = scmp.le.s32.totalorder 2, %s17
      // Predicated region
      $region41: #{tpu_custom_call.1} parent=5 // pred_check
        %p225 = pneg %p224
      $region42: #{tpu_custom_call.1} parent=5 // pred_check_branch
        %227 = sbr.rel (%p225) target = $region44
      $region43: #{tpu_custom_call.1} parent=5 // pred_region
        %s228 = ssub.s32 %s17, 2
        // Predicated region
        $region45: #{tpu_custom_call.1} parent=43 // pred_check
          %p229 = pneg %p98
        $region46: #{tpu_custom_call.1} parent=43 // pred_check_branch
          %231 = sbr.rel (%p229) target = $region48
        $region47: #{tpu_custom_call.1} parent=43 // pred_region
          %s232 = sand.u32 %s83, 1
          %s233 = scalar_lea.sflag [#allocation4], %s232
          %s234 = sand.u32 %s83, 1
          %s235 = smul.addr %s234, 8
          %s236 = scalar_lea.vmem [#allocation7], %s235
          %237 = dma.done %s233, 128
        $region48: #{tpu_custom_call.1} parent=43 // pred_fallthru
          _
      $region44: #{tpu_custom_call.1} parent=5 // pred_fallthru
        _
    $region6: #{tpu_custom_call.1} parent=1 // loop_footer
      %s21 = sadd.s32 1, %s17
    $region7: #{tpu_custom_call.1} parent=1 // loop_footer_branch
      %16 = sbr.rel target = $region3
    $region8: #{tpu_custom_call.1} parent=1 // loop_exit
      _
    %238 = vsyncpa [#allocation3], 1
    %s239 = scalar_lea.sflag [#allocation3], 1
    %240 = vsyncpa %s239, 1
    %241 = vsyncpa [#allocation6], 1
    %s242 = scalar_lea.sflag [#allocation6], 1
    %243 = vsyncpa %s242, 1
    %244 = vsyncpa [#allocation4], 1
    %s245 = scalar_lea.sflag [#allocation4], 1
    %246 = vsyncpa %s245, 1

</llo_original>
